<compile_context>
chip_gen: v7x
topology: tpu7x:2x2x1
jax: 0.10.0
libtpu: 0.0.40
codegen_flags: <defaults>
</compile_context>

<pallas_src>
import functools
import math

import jax
import jax.numpy as jnp
import numpy as np
from jax.experimental import pallas as pl
from jax.experimental.pallas import tpu as pltpu

BLOCK_B = 4  # batches per grid step; with L=32 the lane width is 4*32 = 128.


def _point_attention_kernel(xqk_ref, xv_ref, wqk_ref, wv_ref, bias_ref, mask_ref,
                            out_ref, *, inv_sqrt_l):
    # xqk_ref, xv_ref : (1, N, BLOCK_B*D)      bf16   wide point clouds
    # wqk_ref, wv_ref : (BLOCK_B*D, BLOCK_B*L) bf16   block-diagonal conv weights
    # bias_ref        : (1, BLOCK_B*L)         f32    v-conv bias, tiled per batch
    # mask_ref        : (BLOCK_B*L, BLOCK_B*L) f32    0 on own-batch block, -1e30 off it
    # out_ref         : (1, N, BLOCK_B*L)             out^T slab (lane-dense store)
    x_qk = xqk_ref[0]
    x_v = xv_ref[0]

    # 1x1 convs as one matmul each (MXU, bf16 operands, f32 accumulation).
    #   qw[n, b*L+l] = Q[b, l, n]    vw[n, b*L+l] = V[b, l, n]
    qw = jnp.dot(x_qk, wqk_ref[...], preferred_element_type=jnp.float32)
    vw = jnp.dot(x_v, wv_ref[...], preferred_element_type=jnp.float32) + bias_ref[...]

    # Scores over latent channels: s[b*L+i, b'*L+j] = sum_n Q[b,i,n]*Q[b',j,n].
    # Only the block-diagonal (b == b') part is wanted; the additive mask kills the
    # rest before the softmax.  (Kept f32: tiny 8-deep contraction.)
    s = jax.lax.dot_general(qw, qw, dimension_numbers=(((0,), (0,)), ((), ())),
                            preferred_element_type=jnp.float32)
    s = s * inv_sqrt_l + mask_ref[...]

    # Row softmax in f32 (== per-batch softmax thanks to the mask).
    s = s - jnp.max(s, axis=-1, keepdims=True)
    p = jnp.exp(s)
    a = p * pl.reciprocal(jnp.sum(p, axis=-1, keepdims=True), approx=True)

    # out^T[n, b*L+l] = sum_m A[b,l,m] * V[b,m,n]  -> (N, BLOCK_B*L), unmasked stores.
    out_t = jax.lax.dot_general(
        vw.astype(jnp.bfloat16), a.astype(jnp.bfloat16),
        dimension_numbers=(((1,), (1,)), ((), ())),
        preferred_element_type=jnp.float32)
    out_ref[0] = out_t.astype(out_ref.dtype)


def point_attention_head(qk, v, w_qk, w_v, b_v):
    """qk, v: (B, N, point_dim); w_qk, w_v: (L, point_dim); b_v: (L,). Returns (B, L, N)."""
    qk = jnp.asarray(qk)
    v = jnp.asarray(v)
    B, N, D = qk.shape
    L = w_qk.shape[0]

    G = -(-B // BLOCK_B)          # ceil(B / BLOCK_B) batch-blocks (grid steps)
    B_pad = G * BLOCK_B
    BD = BLOCK_B * D
    BL = BLOCK_B * L

    def to_wide(x):
        if B_pad != B:
            x = jnp.pad(x, ((0, B_pad - B), (0, 0), (0, 0)))
        # (B_pad, N, D) -> (G, BLOCK_B, N, D) -> (G, N, BLOCK_B, D) -> (G, N, BLOCK_B*D)
        x = x.reshape(G, BLOCK_B, N, D).transpose(0, 2, 1, 3).reshape(G, N, BD)
        return x.astype(jnp.bfloat16)

    xqk_w = to_wide(qk)
    xv_w = to_wide(v)

    # Block-diagonal 1x1-conv weights: one matmul projects all BLOCK_B batches at once.
    eye = jnp.eye(BLOCK_B, dtype=jnp.float32)
    wqk_bd = jnp.kron(eye, jnp.asarray(w_qk, jnp.float32).T).astype(jnp.bfloat16)
    wv_bd = jnp.kron(eye, jnp.asarray(w_v, jnp.float32).T).astype(jnp.bfloat16)
    bias_w = jnp.tile(jnp.asarray(b_v, jnp.float32), BLOCK_B).reshape(1, BL)

    # Additive mask: keep each batch's own (L, L) score block, kill cross-batch blocks.
    blk_id = jnp.arange(BL, dtype=jnp.int32) // L
    mask_bias = jnp.where(blk_id[:, None] == blk_id[None, :], 0.0, -1e30)
    mask_bias = mask_bias.astype(jnp.float32)

    kernel = functools.partial(_point_attention_kernel, inv_sqrt_l=1.0 / math.sqrt(L))

    out_wide = pl.pallas_call(
        kernel,
        out_shape=jax.ShapeDtypeStruct((G, N, BL), qk.dtype),
        grid=(G,),
        in_specs=[
            pl.BlockSpec((1, N, BD), lambda g: (g, 0, 0)),   # qk (wide)
            pl.BlockSpec((1, N, BD), lambda g: (g, 0, 0)),   # v  (wide)
            pl.BlockSpec((BD, BL), lambda g: (0, 0)),        # W_qk block-diag (resident)
            pl.BlockSpec((BD, BL), lambda g: (0, 0)),        # W_v  block-diag (resident)
            pl.BlockSpec((1, BL), lambda g: (0, 0)),         # b_v tiled
            pl.BlockSpec((BL, BL), lambda g: (0, 0)),        # additive block mask
        ],
        out_specs=pl.BlockSpec((1, N, BL), lambda g: (g, 0, 0)),
        compiler_params=pltpu.CompilerParams(
            dimension_semantics=("parallel",),    # batch-block axis; v7x's 2 TCs split it
            vmem_limit_bytes=32 * 1024 * 1024,    # fits v5e/v6e (128 MiB) and v7x (64 MiB)
        ),
    )(xqk_w, xv_w, wqk_bd, wv_bd, bias_w, mask_bias)

    # (G, N, BLOCK_B*L) -> (B, L, N): pure layout plumbing in the wrapper.
    out = out_wide.reshape(G, N, BLOCK_B, L).transpose(0, 2, 3, 1).reshape(B_pad, L, N)
    return out[:B]


def _reference(qk, v, w_qk, w_v, b_v):
    # Pure-JAX f32 reference mirroring the PyTorch forward.
    q = jnp.einsum('ld,bnd->bln', w_qk, qk)                  # (B, L, N), K == Q
    vv = jnp.einsum('ld,bnd->bln', w_v, v) + b_v[None, :, None]
    s = jnp.einsum('bln,bmn->blm', q, q) / math.sqrt(q.shape[1])
    a = jax.nn.softmax(s, axis=-1)
    return jnp.einsum('blm,bmn->bln', a, vv)


if __name__ == "__main__":
    B, N, point_dim, latent_dim = 2, 8, 4, 32

    key = jax.random.PRNGKey(0)
    k1, k2, k3, k4, k5 = jax.random.split(key, 5)

    qk = jax.random.normal(k1, (B, N, point_dim), dtype=jnp.float32)
    v = jax.random.normal(k2, (B, N, point_dim), dtype=jnp.float32)

    # PyTorch-like uniform init for the 1x1-conv weights/bias.
    bound = 1.0 / math.sqrt(point_dim)
    w_qk = jax.random.uniform(k3, (latent_dim, point_dim), jnp.float32, -bound, bound)
    w_v = jax.random.uniform(k4, (latent_dim, point_dim), jnp.float32, -bound, bound)
    b_v = jax.random.uniform(k5, (latent_dim,), jnp.float32, -bound, bound)

    out = jax.block_until_ready(point_attention_head(qk, v, w_qk, w_v, b_v))
    ref = jax.block_until_ready(_reference(qk, v, w_qk, w_v, b_v))

    assert out.shape == (B, latent_dim, N)
    # bf16 matmul operands (f32 accumulation) -> relaxed tolerance vs the f32 reference.
    np.testing.assert_allclose(np.asarray(out), np.asarray(ref), rtol=2e-2, atol=1e-2)

    print("KERNEL_OK")
</pallas_src>

<mosaic_0001>
module attributes {stable_mosaic.version = 11 : i64} {
  func.func @_point_attention_kernel(%arg0: i32, %arg1: memref<1x8x16xbf16, #tpu.memory_space<vmem>>, %arg2: memref<1x8x16xbf16, #tpu.memory_space<vmem>>, %arg3: memref<16x128xbf16, #tpu.memory_space<vmem>>, %arg4: memref<16x128xbf16, #tpu.memory_space<vmem>>, %arg5: memref<1x128xf32, #tpu.memory_space<vmem>>, %arg6: memref<128x128xf32, #tpu.memory_space<vmem>>, %arg7: memref<1x8x128xf32, #tpu.memory_space<vmem>>) attributes {dimension_semantics = [#tpu.dimension_semantics<parallel>], iteration_bounds = array<i64: 1>, scalar_prefetch = 0 : i64, scratch_operands = 0 : i64, tpu.core_type = #tpu.core_type<tc>, window_params = [{transform_indices = @transform_0, window_bounds = array<i64: 1, 8, 16>}, {transform_indices = @transform_1, window_bounds = array<i64: 1, 8, 16>}, {pipeline_mode = #tpu.pipeline_mode<synchronous>, transform_indices = @transform_2, window_bounds = array<i64: 16, 128>}, {pipeline_mode = #tpu.pipeline_mode<synchronous>, transform_indices = @transform_3, window_bounds = array<i64: 16, 128>}, {pipeline_mode = #tpu.pipeline_mode<synchronous>, transform_indices = @transform_4, window_bounds = array<i64: 1, 128>}, {pipeline_mode = #tpu.pipeline_mode<synchronous>, transform_indices = @transform_5, window_bounds = array<i64: 128, 128>}, {transform_indices = @transform_6, window_bounds = array<i64: 1, 8, 128>}]} {
    %c0 = arith.constant 0 : index
    %c0_0 = arith.constant 0 : index
    %c0_1 = arith.constant 0 : index
    %0 = vector.load %arg1[%c0, %c0_0, %c0_1] : memref<1x8x16xbf16, #tpu.memory_space<vmem>>, vector<1x8x16xbf16>
    %1 = vector.shape_cast %0 : vector<1x8x16xbf16> to vector<8x16xbf16>
    %c0_2 = arith.constant 0 : index
    %c0_3 = arith.constant 0 : index
    %c0_4 = arith.constant 0 : index
    %2 = vector.load %arg2[%c0_2, %c0_3, %c0_4] : memref<1x8x16xbf16, #tpu.memory_space<vmem>>, vector<1x8x16xbf16>
    %3 = vector.shape_cast %2 : vector<1x8x16xbf16> to vector<8x16xbf16>
    %c0_5 = arith.constant 0 : index
    %c0_6 = arith.constant 0 : index
    %4 = vector.load %arg3[%c0_5, %c0_6] : memref<16x128xbf16, #tpu.memory_space<vmem>>, vector<16x128xbf16>
    %cst = arith.constant dense<0.000000e+00> : vector<8x128xf32>
    %5 = tpu.matmul %1, %4, %cst {dimension_numbers = #tpu.dot_dimension_numbers<[1], [0], [0], [1], [0, 0, 1, 1], [], []>} : vector<8x16xbf16>, vector<16x128xbf16>, vector<8x128xf32> -> vector<8x128xf32>
    %c0_7 = arith.constant 0 : index
    %c0_8 = arith.constant 0 : index
    %6 = vector.load %arg4[%c0_7, %c0_8] : memref<16x128xbf16, #tpu.memory_space<vmem>>, vector<16x128xbf16>
    %cst_9 = arith.constant dense<0.000000e+00> : vector<8x128xf32>
    %7 = tpu.matmul %3, %6, %cst_9 {dimension_numbers = #tpu.dot_dimension_numbers<[1], [0], [0], [1], [0, 0, 1, 1], [], []>} : vector<8x16xbf16>, vector<16x128xbf16>, vector<8x128xf32> -> vector<8x128xf32>
    %c0_10 = arith.constant 0 : index
    %c0_11 = arith.constant 0 : index
    %8 = vector.load %arg5[%c0_10, %c0_11] : memref<1x128xf32, #tpu.memory_space<vmem>>, vector<1x128xf32>
    %9 = vector.broadcast %8 : vector<1x128xf32> to vector<8x128xf32>
    %10 = arith.addf %7, %9 : vector<8x128xf32>
    %cst_12 = arith.constant dense<0.000000e+00> : vector<128x128xf32>
    %11 = tpu.matmul %5, %5, %cst_12 {dimension_numbers = #tpu.dot_dimension_numbers<[0], [0], [1], [1], [0, 1, 1, 1], [], []>} : vector<8x128xf32>, vector<8x128xf32>, vector<128x128xf32> -> vector<128x128xf32>
    %cst_13 = arith.constant 0.176776692 : f32
    %12 = vector.broadcast %cst_13 : f32 to vector<128x128xf32>
    %13 = arith.mulf %11, %12 : vector<128x128xf32>
    %c0_14 = arith.constant 0 : index
    %c0_15 = arith.constant 0 : index
    %14 = vector.load %arg6[%c0_14, %c0_15] : memref<128x128xf32, #tpu.memory_space<vmem>>, vector<128x128xf32>
    %15 = arith.addf %13, %14 : vector<128x128xf32>
    %cst_16 = arith.constant dense<0xFF800000> : vector<128xf32>
    %16 = vector.multi_reduction <maximumf>, %15, %cst_16 [1] : vector<128x128xf32> to vector<128xf32>
    %17 = vector.shape_cast %16 : vector<128xf32> to vector<128x1xf32>
    %18 = vector.broadcast %17 : vector<128x1xf32> to vector<128x128xf32>
    %19 = arith.subf %15, %18 : vector<128x128xf32>
    %20 = math.exp %19 : vector<128x128xf32>
    %cst_17 = arith.constant dense<0.000000e+00> : vector<128xf32>
    %21 = vector.multi_reduction <add>, %20, %cst_17 [1] : vector<128x128xf32> to vector<128xf32>
    %22 = vector.shape_cast %21 : vector<128xf32> to vector<128x1xf32>
    %23 = tpu.reciprocal %22 {approx = true} : vector<128x1xf32> -> vector<128x1xf32>
    %24 = vector.broadcast %23 : vector<128x1xf32> to vector<128x128xf32>
    %25 = arith.mulf %20, %24 : vector<128x128xf32>
    %26 = arith.truncf %10 : vector<8x128xf32> to vector<8x128xbf16>
    %27 = arith.truncf %25 : vector<128x128xf32> to vector<128x128xbf16>
    %cst_18 = arith.constant dense<0.000000e+00> : vector<8x128xf32>
    %28 = tpu.matmul %26, %27, %cst_18 {dimension_numbers = #tpu.dot_dimension_numbers<[1], [1], [0], [0], [0, 0, 1, 0], [], []>} : vector<8x128xbf16>, vector<128x128xbf16>, vector<8x128xf32> -> vector<8x128xf32>
    %c0_19 = arith.constant 0 : index
    %c0_20 = arith.constant 0 : index
    %c0_21 = arith.constant 0 : index
    %29 = vector.load %arg7[%c0_19, %c0_20, %c0_21] : memref<1x8x128xf32, #tpu.memory_space<vmem>>, vector<1x8x128xf32>
    %30 = vector.shape_cast %29 : vector<1x8x128xf32> to vector<8x128xf32>
    %31 = vector.shape_cast %28 : vector<8x128xf32> to vector<1x8x128xf32>
    tpu.vector_store %arg7[%c0_19, %c0_20, %c0_21], %31 {strides = array<i32>} : memref<1x8x128xf32, #tpu.memory_space<vmem>>, vector<1x8x128xf32>,
    return
  }
  func.func @transform_0(%arg0: i32) -> (i32, i32, i32) {
    %c0_i32 = arith.constant 0 : i32
    %c0_i32_0 = arith.constant 0 : i32
    %c0_i32_1 = arith.constant 0 : i32
    return %arg0, %c0_i32, %c0_i32_0 : i32, i32, i32
  }
  func.func @transform_1(%arg0: i32) -> (i32, i32, i32) {
    %c0_i32 = arith.constant 0 : i32
    %c0_i32_0 = arith.constant 0 : i32
    %c0_i32_1 = arith.constant 0 : i32
    return %arg0, %c0_i32, %c0_i32_0 : i32, i32, i32
  }
  func.func @transform_2(%arg0: i32) -> (i32, i32) {
    %c0_i32 = arith.constant 0 : i32
    %c0_i32_0 = arith.constant 0 : i32
    %c0_i32_1 = arith.constant 0 : i32
    return %c0_i32, %c0_i32_0 : i32, i32
  }
  func.func @transform_3(%arg0: i32) -> (i32, i32) {
    %c0_i32 = arith.constant 0 : i32
    %c0_i32_0 = arith.constant 0 : i32
    %c0_i32_1 = arith.constant 0 : i32
    return %c0_i32, %c0_i32_0 : i32, i32
  }
  func.func @transform_4(%arg0: i32) -> (i32, i32) {
    %c0_i32 = arith.constant 0 : i32
    %c0_i32_0 = arith.constant 0 : i32
    %c0_i32_1 = arith.constant 0 : i32
    return %c0_i32, %c0_i32_0 : i32, i32
  }
  func.func @transform_5(%arg0: i32) -> (i32, i32) {
    %c0_i32 = arith.constant 0 : i32
    %c0_i32_0 = arith.constant 0 : i32
    %c0_i32_1 = arith.constant 0 : i32
    return %c0_i32, %c0_i32_0 : i32, i32
  }
  func.func @transform_6(%arg0: i32) -> (i32, i32, i32) {
    %c0_i32 = arith.constant 0 : i32
    %c0_i32_0 = arith.constant 0 : i32
    %c0_i32_1 = arith.constant 0 : i32
    return %arg0, %c0_i32, %c0_i32_0 : i32, i32, i32
  }
}

</mosaic_0001>

<llo_original>
// kernel: tpu_custom_call.1
$region0: #{tpu_custom_call.1}
  #allocation0 [shape = 'u32[]', space=smem, size = 0x4, offset = 0x4, fixed_abs, tag = 'smem constant byte address 0x4 - core index']
  #allocation1 [shape = 'u32[144,128]{1,0:T(1,128)}', space=vmem, size = 0x12000, scoped, tag = 'internal scratch']
  %s0 = inlined_call_operand.hbm [shape: bf16[1,8,16], index: 0, kind: input, shape index: {}]
  %s1 = inlined_call_operand.hbm [shape: bf16[1,8,16], index: 1, kind: input, shape index: {}]
  %s2 = inlined_call_operand.hbm [shape: bf16[16,128], index: 2, kind: input, shape index: {}]
  %s3 = inlined_call_operand.vmem [shape: bf16[16,128], index: 3, kind: input, shape index: {}]
  %s4 = inlined_call_operand.vmem [shape: f32[1,128], index: 4, kind: input, shape index: {}]
  %s5 = inlined_call_operand.hbm [shape: f32[128,128], index: 5, kind: input, shape index: {}]
  %s6 = inlined_call_operand.hbm [shape: f32[1,8,128], index: 6, kind: output, shape index: {}]
  %s7 = sld [smem:[#allocation0]]
  $region50: #{tpu_custom_call.1} parent=0
    _
  %s9 = ssub.s32 1, %s7
  %s10 = scalar_select 0, %s9, %s7
  $region1: #{tpu_custom_call.1} parent=0
    #allocation2 [shape = 'u8[2048]{0}', space=vmem, size = 0x800, scoped, tag = 'input window, operand 0, single buffered']
    #allocation3 [shape = 's32[1]{0}', space=sflag, size = 0x4, scoped, tag = 'scoped memory for tpu_custom_call.1']
    #allocation4 [shape = 's32[1]{0}', space=sflag, size = 0x4, scoped, tag = 'scoped memory for tpu_custom_call.1']
    #allocation5 [shape = 'u8[2048]{0}', space=vmem, size = 0x800, scoped, tag = 'input window, operand 1, single buffered']
    #allocation6 [shape = 's32[1]{0}', space=sflag, size = 0x4, scoped, tag = 'scoped memory for tpu_custom_call.1']
    #allocation7 [shape = 'u8[4096]{0}', space=vmem, size = 0x1000, scoped, tag = 'input window, operand 2, single buffered']
    #allocation8 [shape = 'u8[65536]{0}', space=vmem, size = 0x10000, scoped, tag = 'input window, operand 5, single buffered']
    #allocation9 [shape = 's32[1]{0}', space=sflag, size = 0x4, scoped, tag = 'scoped memory for tpu_custom_call.1']
    #allocation10 [shape = 'u8[4096]{0}', space=vmem, size = 0x1000, scoped, tag = 'output window, operand 0, single buffered']
    %11 = vsyncpa [#allocation3], 0
    %12 = vsyncpa [#allocation6], 0
    %13 = vsyncpa [#allocation9], 0
    %14 = vsyncpa [#allocation4], 0
    // Predicated region
    $region2: #{tpu_custom_call.1} parent=1 // pred_check
      _
    $region3: #{tpu_custom_call.1} parent=1 // pred_check_branch
      %16 = sbr.rel (0) target = $region5
    $region4: #{tpu_custom_call.1} parent=1 // pred_region
      %s18 = ssub.s32 64, 64
      %19 = vsyncadd [#allocation3], %s18
      %s21 = sshll.u32 [#allocation2], 4
      %s22 = int_to_ptr.vmem [resolvable:$true] %s21
      %24 = dma.hbm_to_vmem [thread:$0]  %s0, 64, %s22, [#allocation3]
    $region5: #{tpu_custom_call.1} parent=1 // pred_fallthru
      _
    // Predicated region
    $region6: #{tpu_custom_call.1} parent=1 // pred_check
      _
    $region7: #{tpu_custom_call.1} parent=1 // pred_check_branch
      %26 = sbr.rel (0) target = $region9
    $region8: #{tpu_custom_call.1} parent=1 // pred_region
      %s28 = ssub.s32 64, 64
      %29 = vsyncadd [#allocation6], %s28
      %s31 = sshll.u32 [#allocation5], 4
      %s32 = int_to_ptr.vmem [resolvable:$true] %s31
      %34 = dma.hbm_to_vmem [thread:$0]  %s1, 64, %s32, [#allocation6]
    $region9: #{tpu_custom_call.1} parent=1 // pred_fallthru
      _
    // Predicated region
    $region10: #{tpu_custom_call.1} parent=1 // pred_check
      _
    $region11: #{tpu_custom_call.1} parent=1 // pred_check_branch
      %36 = sbr.rel (0) target = $region13
    $region12: #{tpu_custom_call.1} parent=1 // pred_region
      %s38 = ssub.s32 128, 128
      %39 = vsyncadd [#allocation6], %s38
      %s40 = sshll.u32 [#allocation7], 4
      %s41 = int_to_ptr.vmem [resolvable:$true] %s40
      %46 = dma.hbm_to_vmem [thread:$0]  %s2, 128, %s41, [#allocation6], 64, 64, 4
    $region13: #{tpu_custom_call.1} parent=1 // pred_fallthru
      _
    // Predicated region
    $region14: #{tpu_custom_call.1} parent=1 // pred_check
      _
    $region15: #{tpu_custom_call.1} parent=1 // pred_check_branch
      %48 = sbr.rel (0) target = $region17
    $region16: #{tpu_custom_call.1} parent=1 // pred_region
      _
    $region17: #{tpu_custom_call.1} parent=1 // pred_fallthru
      _
    // Predicated region
    $region18: #{tpu_custom_call.1} parent=1 // pred_check
      _
    $region19: #{tpu_custom_call.1} parent=1 // pred_check_branch
      %50 = sbr.rel (0) target = $region21
    $region20: #{tpu_custom_call.1} parent=1 // pred_region
      _
    $region21: #{tpu_custom_call.1} parent=1 // pred_fallthru
      _
    // Predicated region
    $region22: #{tpu_custom_call.1} parent=1 // pred_check
      _
    $region23: #{tpu_custom_call.1} parent=1 // pred_check_branch
      %52 = sbr.rel (0) target = $region25
    $region24: #{tpu_custom_call.1} parent=1 // pred_region
      %s54 = ssub.s32 2048, 2048
      %55 = vsyncadd [#allocation9], %s54
      %s56 = sshll.u32 [#allocation8], 4
      %s57 = int_to_ptr.vmem [resolvable:$true] %s56
      %62 = dma.hbm_to_vmem [thread:$0]  %s5, 2048, %s57, [#allocation9], 128, 128, 8
    $region25: #{tpu_custom_call.1} parent=1 // pred_fallthru
      _
    // Predicated region
    $region26: #{tpu_custom_call.1} parent=1 // pred_check
      _
    $region27: #{tpu_custom_call.1} parent=1 // pred_check_branch
      %64 = sbr.rel (0) target = $region29
    $region28: #{tpu_custom_call.1} parent=1 // pred_region
      %65 = dma.done [#allocation3], 64
    $region29: #{tpu_custom_call.1} parent=1 // pred_fallthru
      _
    // Predicated region
    $region30: #{tpu_custom_call.1} parent=1 // pred_check
      _
    $region31: #{tpu_custom_call.1} parent=1 // pred_check_branch
      %67 = sbr.rel (0) target = $region33
    $region32: #{tpu_custom_call.1} parent=1 // pred_region
      %68 = dma.done [#allocation6], 64
    $region33: #{tpu_custom_call.1} parent=1 // pred_fallthru
      _
    // Predicated region
    $region34: #{tpu_custom_call.1} parent=1 // pred_check
      _
    $region35: #{tpu_custom_call.1} parent=1 // pred_check_branch
      %70 = sbr.rel (0) target = $region37
    $region36: #{tpu_custom_call.1} parent=1 // pred_region
      %71 = dma.done [#allocation6], 128
    $region37: #{tpu_custom_call.1} parent=1 // pred_fallthru
      _
    // Predicated region
    $region38: #{tpu_custom_call.1} parent=1 // pred_check
      _
    $region39: #{tpu_custom_call.1} parent=1 // pred_check_branch
      %73 = sbr.rel (0) target = $region41
    $region40: #{tpu_custom_call.1} parent=1 // pred_region
      %74 = dma.done [#allocation9], 2048
    $region41: #{tpu_custom_call.1} parent=1 // pred_fallthru
      _
    %v76 = vld [vmem:[#allocation2] sm:$0xf]
    %v77 = vld [vmem:[#allocation5] sm:$0xf]
    %v78 = vld [vmem:[#allocation7] sm:$0xf]
    %v79 = vld [vmem:[#allocation7 + $0x4] sm:$0xf]
    %v82 = vunpack.c.l.b16 %v78
    %v83 = vunpack.c.l.b16 %v79
    %v84 = vpack.c.b16 %v83, %v82
    %vm86 = vcmask 130048
    %v88 = vsel %vm86, %v76, 0
    %90 = vmatprep.subr.bf16.mxu0 0
    %91 = vmatpush1.bf16.msra.mxu0 %v84
    %92 = vmatprep.subr.bf16.mxu0 0
    %93 = vmatpush1.bf16.msra.mxu0 0
    %94 = vmatprep.subr.bf16.mxu0 0
    %95 = vmatpush1.bf16.msra.mxu0 0
    %96 = vmatprep.subr.bf16.mxu0 0
    %97 = vmatpush1.bf16.msra.mxu0 0
    %98 = vmatprep.subr.bf16.mxu0 0
    %99 = vmatpush1.bf16.msra.mxu0 0
    %100 = vmatprep.subr.bf16.mxu0 0
    %101 = vmatpush1.bf16.msra.mxu0 0
    %102 = vmatprep.subr.bf16.mxu0 0
    %103 = vmatpush1.bf16.msra.mxu0 0
    %104 = vmatprep.subr.bf16.mxu0 0
    %105 = vmatpush1.bf16.msra.mxu0 0
    %106 = vmatprep.subr.bf16.mxu0 0
    %107 = vmatpush1.bf16.msra.mxu0 0
    %108 = vmatprep.subr.bf16.mxu0 0
    %109 = vmatpush1.bf16.msra.mxu0 0
    %110 = vmatprep.subr.bf16.mxu0 0
    %111 = vmatpush1.bf16.msra.mxu0 0
    %112 = vmatprep.subr.bf16.mxu0 0
    %113 = vmatpush1.bf16.msra.mxu0 0
    %114 = vmatprep.subr.bf16.mxu0 0
    %115 = vmatpush1.bf16.msra.mxu0 0
    %116 = vmatprep.subr.bf16.mxu0 0
    %117 = vmatpush1.bf16.msra.mxu0 0
    %118 = vmatprep.subr.bf16.mxu0 0
    %119 = vmatpush1.bf16.msra.mxu0 0
    %120 = vmatprep.subr.bf16.mxu0 0
    %121 = vmatpush1.bf16.msra.mxu0 0
    %122 = vmatprep.mubr.bf16.mxu0 0
    %123 = vmatmul.mubr.bf16.gmra.mrb[0].mxu0 %v88
    %v124 = vpop.f32.mrb[0].mxu0
    %v125 = vadd.f32 0.0, %v124
    %v126 = vpop.f32.mrb[0].mxu0
    %v127 = vpop.f32.mrb[0].mxu0
    %v128 = vpop.f32.mrb[0].mxu0
    %129 = vdwg.mxu0
    %v130 = vld [vmem:[%s3] sm:$0xf]
    %v131 = vld [vmem:[%s3 + $0x4] sm:$0xf]
    %v132 = vld [vmem:[%s4] sm:$0x1]
    %v134 = vlaneseq
    %v135 = vshrl.u32 %v134, 7
    %v136 = vsub.s32 0, %v135
    %v137 = vrot.slane %v132, %v136
    %v141 = vunpack.c.l.b16 %v130
    %v142 = vunpack.c.l.b16 %v131
    %v143 = vpack.c.b16 %v142, %v141
    %v146 = vsel %vm86, %v77, 0
    %148 = vmatprep.subr.bf16.mxu0 0
    %149 = vmatpush1.bf16.msra.mxu0 %v143
    %150 = vmatprep.subr.bf16.mxu0 0
    %151 = vmatpush1.bf16.msra.mxu0 0
    %152 = vmatprep.subr.bf16.mxu0 0
    %153 = vmatpush1.bf16.msra.mxu0 0
    %154 = vmatprep.subr.bf16.mxu0 0
    %155 = vmatpush1.bf16.msra.mxu0 0
    %156 = vmatprep.subr.bf16.mxu0 0
    %157 = vmatpush1.bf16.msra.mxu0 0
    %158 = vmatprep.subr.bf16.mxu0 0
    %159 = vmatpush1.bf16.msra.mxu0 0
    %160 = vmatprep.subr.bf16.mxu0 0
    %161 = vmatpush1.bf16.msra.mxu0 0
    %162 = vmatprep.subr.bf16.mxu0 0
    %163 = vmatpush1.bf16.msra.mxu0 0
    %164 = vmatprep.subr.bf16.mxu0 0
    %165 = vmatpush1.bf16.msra.mxu0 0
    %166 = vmatprep.subr.bf16.mxu0 0
    %167 = vmatpush1.bf16.msra.mxu0 0
    %168 = vmatprep.subr.bf16.mxu0 0
    %169 = vmatpush1.bf16.msra.mxu0 0
    %170 = vmatprep.subr.bf16.mxu0 0
    %171 = vmatpush1.bf16.msra.mxu0 0
    %172 = vmatprep.subr.bf16.mxu0 0
    %173 = vmatpush1.bf16.msra.mxu0 0
    %174 = vmatprep.subr.bf16.mxu0 0
    %175 = vmatpush1.bf16.msra.mxu0 0
    %176 = vmatprep.subr.bf16.mxu0 0
    %177 = vmatpush1.bf16.msra.mxu0 0
    %178 = vmatprep.subr.bf16.mxu0 0
    %179 = vmatpush1.bf16.msra.mxu0 0
    %180 = vmatprep.mubr.bf16.mxu0 0
    %181 = vmatmul.mubr.bf16.gmra.mrb[0].mxu0 %v146
    %v182 = vpop.f32.mrb[0].mxu0
    %v183 = vadd.f32 %v137, %v182
    %v184 = vpop.f32.mrb[0].mxu0
    %v185 = vpop.f32.mrb[0].mxu0
    %v186 = vpop.f32.mrb[0].mxu0
    %187 = vdwg.mxu0
    %188 = vxpose.xlu0.b32.start [1/16] %v125, 128
    %189 = vxpose.xlu0.b32.cont [2/16] 0.0, 128
    %190 = vxpose.xlu0.b32.cont [3/16] 0.0, 128
    %191 = vxpose.xlu0.b32.cont [4/16] 0.0, 128
    %192 = vxpose.xlu0.b32.cont [5/16] 0.0, 128
    %193 = vxpose.xlu0.b32.cont [6/16] 0.0, 128
    %194 = vxpose.xlu0.b32.cont [7/16] 0.0, 128
    %195 = vxpose.xlu0.b32.cont [8/16] 0.0, 128
    %196 = vxpose.xlu0.b32.cont [9/16] 0.0, 128
    %197 = vxpose.xlu0.b32.cont [10/16] 0.0, 128
    %198 = vxpose.xlu0.b32.cont [11/16] 0.0, 128
    %199 = vxpose.xlu0.b32.cont [12/16] 0.0, 128
    %200 = vxpose.xlu0.b32.cont [13/16] 0.0, 128
    %201 = vxpose.xlu0.b32.cont [14/16] 0.0, 128
    %202 = vxpose.xlu0.b32.cont [15/16] 0.0, 128
    %203 = vxpose.xlu0.b32.end [16/16] 0.0, 128
    %v204 = vpop.trf.xlu0
    %v205 = vpop.trf.xlu0
    %v206 = vpop.trf.xlu0
    %v207 = vpop.trf.xlu0
    %v208 = vpop.trf.xlu0
    %v209 = vpop.trf.xlu0
    %v210 = vpop.trf.xlu0
    %v211 = vpop.trf.xlu0
    %v212 = vpop.trf.xlu0
    %v213 = vpop.trf.xlu0
    %v214 = vpop.trf.xlu0
    %v215 = vpop.trf.xlu0
    %v216 = vpop.trf.xlu0
    %v217 = vpop.trf.xlu0
    %v218 = vpop.trf.xlu0
    %v219 = vpop.trf.xlu0
    %vm220 = vcmask 64512
    %v222 = vsel %vm220, %v204, 0
    %v225 = vsel %vm220, %v205, 0
    %v228 = vsel %vm220, %v206, 0
    %v231 = vsel %vm220, %v207, 0
    %v234 = vsel %vm220, %v208, 0
    %v237 = vsel %vm220, %v209, 0
    %v240 = vsel %vm220, %v210, 0
    %v243 = vsel %vm220, %v211, 0
    %v246 = vsel %vm220, %v212, 0
    %v249 = vsel %vm220, %v213, 0
    %v252 = vsel %vm220, %v214, 0
    %v255 = vsel %vm220, %v215, 0
    %v258 = vsel %vm220, %v216, 0
    %v261 = vsel %vm220, %v217, 0
    %v264 = vsel %vm220, %v218, 0
    %v267 = vsel %vm220, %v219, 0
    %269 = vmatprep.subr.mxu0 0.0
    %270 = vmatpush1.msra.mxu0 %v125
    %271 = vmatprep.subr.mxu0 0.0
    %272 = vmatpush1.msra.mxu0 0.0
    %273 = vmatprep.subr.mxu0 0.0
    %274 = vmatpush1.msra.mxu0 0.0
    %275 = vmatprep.subr.mxu0 0.0
    %276 = vmatpush1.msra.mxu0 0.0
    %277 = vmatprep.subr.mxu0 0.0
    %278 = vmatpush1.msra.mxu0 0.0
    %279 = vmatprep.subr.mxu0 0.0
    %280 = vmatpush1.msra.mxu0 0.0
    %281 = vmatprep.subr.mxu0 0.0
    %282 = vmatpush1.msra.mxu0 0.0
    %283 = vmatprep.subr.mxu0 0.0
    %284 = vmatpush1.msra.mxu0 0.0
    %285 = vmatprep.subr.mxu0 0.0
    %286 = vmatpush1.msra.mxu0 0.0
    %287 = vmatprep.subr.mxu0 0.0
    %288 = vmatpush1.msra.mxu0 0.0
    %289 = vmatprep.subr.mxu0 0.0
    %290 = vmatpush1.msra.mxu0 0.0
    %291 = vmatprep.subr.mxu0 0.0
    %292 = vmatpush1.msra.mxu0 0.0
    %293 = vmatprep.subr.mxu0 0.0
    %294 = vmatpush1.msra.mxu0 0.0
    %295 = vmatprep.subr.mxu0 0.0
    %296 = vmatpush1.msra.mxu0 0.0
    %297 = vmatprep.subr.mxu0 0.0
    %298 = vmatpush1.msra.mxu0 0.0
    %299 = vmatprep.subr.mxu0 0.0
    %300 = vmatpush1.msra.mxu0 0.0
    %301 = vmatprep.subr.mxu0 0.0
    %302 = vmatpush1.msra.mxu0 0.0
    %303 = vmatprep.subr.mxu0 0.0
    %304 = vmatpush1.msra.mxu0 0.0
    %305 = vmatprep.subr.mxu0 0.0
    %306 = vmatpush1.msra.mxu0 0.0
    %307 = vmatprep.subr.mxu0 0.0
    %308 = vmatpush1.msra.mxu0 0.0
    %309 = vmatprep.subr.mxu0 0.0
    %310 = vmatpush1.msra.mxu0 0.0
    %311 = vmatprep.subr.mxu0 0.0
    %312 = vmatpush1.msra.mxu0 0.0
    %313 = vmatprep.subr.mxu0 0.0
    %314 = vmatpush1.msra.mxu0 0.0
    %315 = vmatprep.subr.mxu0 0.0
    %316 = vmatpush1.msra.mxu0 0.0
    %317 = vmatprep.subr.mxu0 0.0
    %318 = vmatpush1.msra.mxu0 0.0
    %319 = vmatprep.subr.mxu0 0.0
    %320 = vmatpush1.msra.mxu0 0.0
    %321 = vmatprep.subr.mxu0 0.0
    %322 = vmatpush1.msra.mxu0 0.0
    %323 = vmatprep.subr.mxu0 0.0
    %324 = vmatpush1.msra.mxu0 0.0
    %325 = vmatprep.subr.mxu0 0.0
    %326 = vmatpush1.msra.mxu0 0.0
    %327 = vmatprep.subr.mxu0 0.0
    %328 = vmatpush1.msra.mxu0 0.0
    %329 = vmatprep.subr.mxu0 0.0
    %330 = vmatpush1.msra.mxu0 0.0
    %331 = vmatprep.subr.mxu0 0.0
    %332 = vmatpush1.msra.mxu0 0.0
    %333 = vmatprep.mubr.f32.mxu0 0.0
    %334 = vmatmul.mubr.f32.gmra.mrb[0].mxu0 %v222
    %v335 = vpop.f32.mrb[0].mxu0
    %v336 = vadd.f32 0.0, %v335
    %v337 = vpop.f32.mrb[0].mxu0
    %338 = vmatprep.mubr.f32.mxu0 0.0
    %339 = vmatmul.mubr.f32.gmra.mrb[0].mxu0 %v225
    %v340 = vpop.f32.mrb[0].mxu0
    %v341 = vadd.f32 0.0, %v340
    %v342 = vpop.f32.mrb[0].mxu0
    %343 = vmatprep.mubr.f32.mxu0 0.0
    %344 = vmatmul.mubr.f32.gmra.mrb[0].mxu0 %v228
    %v345 = vpop.f32.mrb[0].mxu0
    %v346 = vadd.f32 0.0, %v345
    %v347 = vpop.f32.mrb[0].mxu0
    %348 = vmatprep.mubr.f32.mxu0 0.0
    %349 = vmatmul.mubr.f32.gmra.mrb[0].mxu0 %v231
    %v350 = vpop.f32.mrb[0].mxu0
    %v351 = vadd.f32 0.0, %v350
    %v352 = vpop.f32.mrb[0].mxu0
    %353 = vmatprep.mubr.f32.mxu0 0.0
    %354 = vmatmul.mubr.f32.gmra.mrb[0].mxu0 %v234
    %v355 = vpop.f32.mrb[0].mxu0
    %v356 = vadd.f32 0.0, %v355
    %v357 = vpop.f32.mrb[0].mxu0
    %358 = vmatprep.mubr.f32.mxu0 0.0
    %359 = vmatmul.mubr.f32.gmra.mrb[0].mxu0 %v237
    %v360 = vpop.f32.mrb[0].mxu0
    %v361 = vadd.f32 0.0, %v360
    %v362 = vpop.f32.mrb[0].mxu0
    %363 = vmatprep.mubr.f32.mxu0 0.0
    %364 = vmatmul.mubr.f32.gmra.mrb[0].mxu0 %v240
    %v365 = vpop.f32.mrb[0].mxu0
    %v366 = vadd.f32 0.0, %v365
    %v367 = vpop.f32.mrb[0].mxu0
    %368 = vmatprep.mubr.f32.mxu0 0.0
    %369 = vmatmul.mubr.f32.gmra.mrb[0].mxu0 %v243
    %v370 = vpop.f32.mrb[0].mxu0
    %v371 = vadd.f32 0.0, %v370
    %v372 = vpop.f32.mrb[0].mxu0
    %373 = vmatprep.mubr.f32.mxu0 0.0
    %374 = vmatmul.mubr.f32.gmra.mrb[0].mxu0 %v246
    %v375 = vpop.f32.mrb[0].mxu0
    %v376 = vadd.f32 0.0, %v375
    %v377 = vpop.f32.mrb[0].mxu0
    %378 = vmatprep.mubr.f32.mxu0 0.0
    %379 = vmatmul.mubr.f32.gmra.mrb[0].mxu0 %v249
    %v380 = vpop.f32.mrb[0].mxu0
    %v381 = vadd.f32 0.0, %v380
    %v382 = vpop.f32.mrb[0].mxu0
    %383 = vmatprep.mubr.f32.mxu0 0.0
    %384 = vmatmul.mubr.f32.gmra.mrb[0].mxu0 %v252
    %v385 = vpop.f32.mrb[0].mxu0
    %v386 = vadd.f32 0.0, %v385
    %v387 = vpop.f32.mrb[0].mxu0
    %388 = vmatprep.mubr.f32.mxu0 0.0
    %389 = vmatmul.mubr.f32.gmra.mrb[0].mxu0 %v255
    %v390 = vpop.f32.mrb[0].mxu0
    %v391 = vadd.f32 0.0, %v390
    %v392 = vpop.f32.mrb[0].mxu0
    %393 = vmatprep.mubr.f32.mxu0 0.0
    %394 = vmatmul.mubr.f32.gmra.mrb[0].mxu0 %v258
    %v395 = vpop.f32.mrb[0].mxu0
    %v396 = vadd.f32 0.0, %v395
    %v397 = vpop.f32.mrb[0].mxu0
    %398 = vmatprep.mubr.f32.mxu0 0.0
    %399 = vmatmul.mubr.f32.gmra.mrb[0].mxu0 %v261
    %v400 = vpop.f32.mrb[0].mxu0
    %v401 = vadd.f32 0.0, %v400
    %v402 = vpop.f32.mrb[0].mxu0
    %403 = vmatprep.mubr.f32.mxu0 0.0
    %404 = vmatmul.mubr.f32.gmra.mrb[0].mxu0 %v264
    %v405 = vpop.f32.mrb[0].mxu0
    %v406 = vadd.f32 0.0, %v405
    %v407 = vpop.f32.mrb[0].mxu0
    %408 = vmatprep.mubr.f32.mxu0 0.0
    %409 = vmatmul.mubr.f32.gmra.mrb[0].mxu0 %v267
    %v410 = vpop.f32.mrb[0].mxu0
    %v411 = vadd.f32 0.0, %v410
    %v412 = vpop.f32.mrb[0].mxu0
    %413 = vdwg.mxu0
    %v414 = vmul.f32 %v336, 0.17677669
    %v415 = vmul.f32 %v341, 0.17677669
    %v416 = vmul.f32 %v346, 0.17677669
    %v417 = vmul.f32 %v351, 0.17677669
    %v418 = vmul.f32 %v356, 0.17677669
    %v419 = vmul.f32 %v361, 0.17677669
    %v420 = vmul.f32 %v366, 0.17677669
    %v421 = vmul.f32 %v371, 0.17677669
    %v422 = vmul.f32 %v376, 0.17677669
    %v423 = vmul.f32 %v381, 0.17677669
    %v424 = vmul.f32 %v386, 0.17677669
    %v425 = vmul.f32 %v391, 0.17677669
    %v426 = vmul.f32 %v396, 0.17677669
    %v427 = vmul.f32 %v401, 0.17677669
    %v428 = vmul.f32 %v406, 0.17677669
    %v429 = vmul.f32 %v411, 0.17677669
    %v430 = vld [vmem:[#allocation8] sm:$0xff]
    %v431 = vld [vmem:[#allocation8 + $0x8] sm:$0xff]
    %v432 = vld [vmem:[#allocation8 + $0x10] sm:$0xff]
    %v433 = vld [vmem:[#allocation8 + $0x18] sm:$0xff]
    %v434 = vld [vmem:[#allocation8 + $0x20] sm:$0xff]
    %v435 = vld [vmem:[#allocation8 + $0x28] sm:$0xff]
    %v436 = vld [vmem:[#allocation8 + $0x30] sm:$0xff]
    %v437 = vld [vmem:[#allocation8 + $0x38] sm:$0xff]
    %v438 = vld [vmem:[#allocation8 + $0x40] sm:$0xff]
    %v439 = vld [vmem:[#allocation8 + $0x48] sm:$0xff]
    %v440 = vld [vmem:[#allocation8 + $0x50] sm:$0xff]
    %v441 = vld [vmem:[#allocation8 + $0x58] sm:$0xff]
    %v442 = vld [vmem:[#allocation8 + $0x60] sm:$0xff]
    %v443 = vld [vmem:[#allocation8 + $0x68] sm:$0xff]
    %v444 = vld [vmem:[#allocation8 + $0x70] sm:$0xff]
    %v445 = vld [vmem:[#allocation8 + $0x78] sm:$0xff]
    %v446 = vadd.f32 %v414, %v430
    %v447 = vadd.f32 %v415, %v431
    %v448 = vadd.f32 %v416, %v432
    %v449 = vadd.f32 %v417, %v433
    %v450 = vadd.f32 %v418, %v434
    %v451 = vadd.f32 %v419, %v435
    %v452 = vadd.f32 %v420, %v436
    %v453 = vadd.f32 %v421, %v437
    %v454 = vadd.f32 %v422, %v438
    %v455 = vadd.f32 %v423, %v439
    %v456 = vadd.f32 %v424, %v440
    %v457 = vadd.f32 %v425, %v441
    %v458 = vadd.f32 %v426, %v442
    %v459 = vadd.f32 %v427, %v443
    %v460 = vadd.f32 %v428, %v444
    %v461 = vadd.f32 %v429, %v445
    %462 = vmax.xlane.f32.xlu0 %v446
    %v463 = vpop.xlane.xlu0 %462
    %464 = vmax.xlane.f32.xlu0 %v447
    %v465 = vpop.xlane.xlu0 %464
    %466 = vmax.xlane.f32.xlu0 %v448
    %v467 = vpop.xlane.xlu0 %466
    %468 = vmax.xlane.f32.xlu0 %v449
    %v469 = vpop.xlane.xlu0 %468
    %470 = vmax.xlane.f32.xlu0 %v450
    %v471 = vpop.xlane.xlu0 %470
    %472 = vmax.xlane.f32.xlu0 %v451
    %v473 = vpop.xlane.xlu0 %472
    %474 = vmax.xlane.f32.xlu0 %v452
    %v475 = vpop.xlane.xlu0 %474
    %476 = vmax.xlane.f32.xlu0 %v453
    %v477 = vpop.xlane.xlu0 %476
    %478 = vmax.xlane.f32.xlu0 %v454
    %v479 = vpop.xlane.xlu0 %478
    %480 = vmax.xlane.f32.xlu0 %v455
    %v481 = vpop.xlane.xlu0 %480
    %482 = vmax.xlane.f32.xlu0 %v456
    %v483 = vpop.xlane.xlu0 %482
    %484 = vmax.xlane.f32.xlu0 %v457
    %v485 = vpop.xlane.xlu0 %484
    %486 = vmax.xlane.f32.xlu0 %v458
    %v487 = vpop.xlane.xlu0 %486
    %488 = vmax.xlane.f32.xlu0 %v459
    %v489 = vpop.xlane.xlu0 %488
    %490 = vmax.xlane.f32.xlu0 %v460
    %v491 = vpop.xlane.xlu0 %490
    %492 = vmax.xlane.f32.xlu0 %v461
    %v493 = vpop.xlane.xlu0 %492
    %v494 = vsub.f32 %v446, %v463
    %v495 = vsub.f32 %v447, %v465
    %v496 = vsub.f32 %v448, %v467
    %v497 = vsub.f32 %v449, %v469
    %v498 = vsub.f32 %v450, %v471
    %v499 = vsub.f32 %v451, %v473
    %v500 = vsub.f32 %v452, %v475
    %v501 = vsub.f32 %v453, %v477
    %v502 = vsub.f32 %v454, %v479
    %v503 = vsub.f32 %v455, %v481
    %v504 = vsub.f32 %v456, %v483
    %v505 = vsub.f32 %v457, %v485
    %v506 = vsub.f32 %v458, %v487
    %v507 = vsub.f32 %v459, %v489
    %v508 = vsub.f32 %v460, %v491
    %v509 = vsub.f32 %v461, %v493
    %v510 = vmul.f32 %v494, 1.442695
    %v511 = vpow.pop %v510
    %v512 = vmul.f32 %v495, 1.442695
    %v513 = vpow.pop %v512
    %v514 = vmul.f32 %v496, 1.442695
    %v515 = vpow.pop %v514
    %v516 = vmul.f32 %v497, 1.442695
    %v517 = vpow.pop %v516
    %v518 = vmul.f32 %v498, 1.442695
    %v519 = vpow.pop %v518
    %v520 = vmul.f32 %v499, 1.442695
    %v521 = vpow.pop %v520
    %v522 = vmul.f32 %v500, 1.442695
    %v523 = vpow.pop %v522
    %v524 = vmul.f32 %v501, 1.442695
    %v525 = vpow.pop %v524
    %v526 = vmul.f32 %v502, 1.442695
    %v527 = vpow.pop %v526
    %v528 = vmul.f32 %v503, 1.442695
    %v529 = vpow.pop %v528
    %v530 = vmul.f32 %v504, 1.442695
    %v531 = vpow.pop %v530
    %v532 = vmul.f32 %v505, 1.442695
    %v533 = vpow.pop %v532
    %v534 = vmul.f32 %v506, 1.442695
    %v535 = vpow.pop %v534
    %v536 = vmul.f32 %v507, 1.442695
    %v537 = vpow.pop %v536
    %v538 = vmul.f32 %v508, 1.442695
    %v539 = vpow.pop %v538
    %v540 = vmul.f32 %v509, 1.442695
    %v541 = vpow.pop %v540
    %542 = vadd.xlane.f32.xlu0 %v511
    %v543 = vpop.xlane.xlu0 %542
    %544 = vadd.xlane.f32.xlu0 %v513
    %v545 = vpop.xlane.xlu0 %544
    %546 = vadd.xlane.f32.xlu0 %v515
    %v547 = vpop.xlane.xlu0 %546
    %548 = vadd.xlane.f32.xlu0 %v517
    %v549 = vpop.xlane.xlu0 %548
    %550 = vadd.xlane.f32.xlu0 %v519
    %v551 = vpop.xlane.xlu0 %550
    %552 = vadd.xlane.f32.xlu0 %v521
    %v553 = vpop.xlane.xlu0 %552
    %554 = vadd.xlane.f32.xlu0 %v523
    %v555 = vpop.xlane.xlu0 %554
    %556 = vadd.xlane.f32.xlu0 %v525
    %v557 = vpop.xlane.xlu0 %556
    %558 = vadd.xlane.f32.xlu0 %v527
    %v559 = vpop.xlane.xlu0 %558
    %560 = vadd.xlane.f32.xlu0 %v529
    %v561 = vpop.xlane.xlu0 %560
    %562 = vadd.xlane.f32.xlu0 %v531
    %v563 = vpop.xlane.xlu0 %562
    %564 = vadd.xlane.f32.xlu0 %v533
    %v565 = vpop.xlane.xlu0 %564
    %566 = vadd.xlane.f32.xlu0 %v535
    %v567 = vpop.xlane.xlu0 %566
    %568 = vadd.xlane.f32.xlu0 %v537
    %v569 = vpop.xlane.xlu0 %568
    %570 = vadd.xlane.f32.xlu0 %v539
    %v571 = vpop.xlane.xlu0 %570
    %572 = vadd.xlane.f32.xlu0 %v541
    %v573 = vpop.xlane.xlu0 %572
    %v574 = vrcp.pop %v543
    %v575 = vrcp.pop %v545
    %v576 = vrcp.pop %v547
    %v577 = vrcp.pop %v549
    %v578 = vrcp.pop %v551
    %v579 = vrcp.pop %v553
    %v580 = vrcp.pop %v555
    %v581 = vrcp.pop %v557
    %v582 = vrcp.pop %v559
    %v583 = vrcp.pop %v561
    %v584 = vrcp.pop %v563
    %v585 = vrcp.pop %v565
    %v586 = vrcp.pop %v567
    %v587 = vrcp.pop %v569
    %v588 = vrcp.pop %v571
    %v589 = vrcp.pop %v573
    %v590 = vmul.f32 %v511, %v574
    %v591 = vmul.f32 %v513, %v575
    %v592 = vmul.f32 %v515, %v576
    %v593 = vmul.f32 %v517, %v577
    %v594 = vmul.f32 %v519, %v578
    %v595 = vmul.f32 %v521, %v579
    %v596 = vmul.f32 %v523, %v580
    %v597 = vmul.f32 %v525, %v581
    %v598 = vmul.f32 %v527, %v582
    %v599 = vmul.f32 %v529, %v583
    %v600 = vmul.f32 %v531, %v584
    %v601 = vmul.f32 %v533, %v585
    %v602 = vmul.f32 %v535, %v586
    %v603 = vmul.f32 %v537, %v587
    %v604 = vmul.f32 %v539, %v588
    %v605 = vmul.f32 %v541, %v589
    %v606 = vpack.c.bf16 %v183, %v183
    %v607 = vpack.c.bf16 %v591, %v590
    %v608 = vpack.c.bf16 %v593, %v592
    %v609 = vpack.c.bf16 %v595, %v594
    %v610 = vpack.c.bf16 %v597, %v596
    %v611 = vpack.c.bf16 %v599, %v598
    %v612 = vpack.c.bf16 %v601, %v600
    %v613 = vpack.c.bf16 %v603, %v602
    %v614 = vpack.c.bf16 %v605, %v604
    %615 = vmatprep.subr.bf16.mxu0 0
    %616 = vmatpush1.bf16.xpose.msra.mxu0 %v607
    %617 = vmatprep.subr.bf16.mxu0 0
    %618 = vmatpush1.bf16.xpose.msra.mxu0 %v608
    %619 = vmatprep.subr.bf16.mxu0 0
    %620 = vmatpush1.bf16.xpose.msra.mxu0 %v609
    %621 = vmatprep.subr.bf16.mxu0 0
    %622 = vmatpush1.bf16.xpose.msra.mxu0 %v610
    %623 = vmatprep.subr.bf16.mxu0 0
    %624 = vmatpush1.bf16.xpose.msra.mxu0 %v611
    %625 = vmatprep.subr.bf16.mxu0 0
    %626 = vmatpush1.bf16.xpose.msra.mxu0 %v612
    %627 = vmatprep.subr.bf16.mxu0 0
    %628 = vmatpush1.bf16.xpose.msra.mxu0 %v613
    %629 = vmatprep.subr.bf16.mxu0 0
    %630 = vmatpush1.bf16.xpose.msra.mxu0 %v614
    %631 = vmatprep.subr.bf16.mxu0 0
    %632 = vmatpush1.bf16.xpose.msra.mxu0 0
    %633 = vmatprep.subr.bf16.mxu0 0
    %634 = vmatpush1.bf16.xpose.msra.mxu0 0
    %635 = vmatprep.subr.bf16.mxu0 0
    %636 = vmatpush1.bf16.xpose.msra.mxu0 0
    %637 = vmatprep.subr.bf16.mxu0 0
    %638 = vmatpush1.bf16.xpose.msra.mxu0 0
    %639 = vmatprep.subr.bf16.mxu0 0
    %640 = vmatpush1.bf16.xpose.msra.mxu0 0
    %641 = vmatprep.subr.bf16.mxu0 0
    %642 = vmatpush1.bf16.xpose.msra.mxu0 0
    %643 = vmatprep.subr.bf16.mxu0 0
    %644 = vmatpush1.bf16.xpose.msra.mxu0 0
    %645 = vmatprep.subr.bf16.mxu0 0
    %646 = vmatpush1.bf16.xpose.msra.mxu0 0
    %647 = vmatprep.mubr.bf16.mxu0 0
    %648 = vmatmul.mubr.bf16.gmra.mrb[0].mxu0 %v606
    %v649 = vpop.f32.mrb[0].mxu0
    %v650 = vadd.f32 0.0, %v649
    %v651 = vpop.f32.mrb[0].mxu0
    %v652 = vpop.f32.mrb[0].mxu0
    %v653 = vpop.f32.mrb[0].mxu0
    %654 = vdwg.mxu0
    %655 = vst [vmem:[#allocation10] sm:$0xff] %v650
    // Predicated region
    $region42: #{tpu_custom_call.1} parent=1 // pred_check
      _
    $region43: #{tpu_custom_call.1} parent=1 // pred_check_branch
      %657 = sbr.rel (0) target = $region45
    $region44: #{tpu_custom_call.1} parent=1 // pred_region
      %s659 = ssub.s32 128, 128
      %660 = vsyncadd [#allocation4], %s659
      %s662 = sshll.u32 [#allocation10], 4
      %s663 = int_to_ptr.vmem [resolvable:$true] %s662
      %665 = dma.vmem_to_hbm [thread:$0]  %s663, 128, %s6, [#allocation4]
    $region45: #{tpu_custom_call.1} parent=1 // pred_fallthru
      _
    // Predicated region
    $region46: #{tpu_custom_call.1} parent=1 // pred_check
      _
    $region47: #{tpu_custom_call.1} parent=1 // pred_check_branch
      %667 = sbr.rel (0) target = $region49
    $region48: #{tpu_custom_call.1} parent=1 // pred_region
      %668 = dma.done [#allocation4], 128
    $region49: #{tpu_custom_call.1} parent=1 // pred_fallthru
      _
    %669 = vsyncpa [#allocation3], 1
    %670 = vsyncpa [#allocation6], 1
    %671 = vsyncpa [#allocation9], 1
    %672 = vsyncpa [#allocation4], 1

</llo_original>
